<compile_context>
chip_gen: v7x
topology: tpu7x:2x2x1
jax: 0.10.0
libtpu: 0.0.40
codegen_flags: <defaults>
</compile_context>

<pallas_src>
import functools

import jax
import jax.numpy as jnp
import numpy as np
from jax import lax
from jax.experimental import pallas as pl
from jax.experimental.pallas import tpu as pltpu


# ---------------------------------------------------------------------------
# Kernel: one batch element per grid step; all heads computed in-step.
# ---------------------------------------------------------------------------
def _self_attention_kernel(
    x_ref,      # (S, d_x)                      bf16
    wqkv_ref,   # (d_x, 2*H*d_k + H*d_v)        bf16  (q part pre-scaled by 1/sqrt(d_k))
    bqkv_ref,   # (1,   2*H*d_k + H*d_v)        f32   (q part pre-scaled)
    wo_ref,     # (H*d_v, d_o)                  bf16  (fo_w.T)
    bo_ref,     # (1, d_o)                      f32
    out_ref,    # (S, d_o)                      f32
    attn_ref,   # (H, 1, S, S)                  f32   (head-major layout via BlockSpec)
    *,
    n_head,
    d_k,
    d_v,
):
    f32 = jnp.float32
    bf16 = jnp.bfloat16

    x = x_ref[...]                                                      # (S, d_x) bf16

    # One lane-dense projection for q, k, v of ALL heads (scale/bias folded).
    qkv = jnp.dot(x, wqkv_ref[...], preferred_element_type=f32) + bqkv_ref[...]
    q_all = qkv[:, : n_head * d_k]                                      # (S, H*d_k)
    k_all = qkv[:, n_head * d_k : 2 * n_head * d_k]                     # (S, H*d_k)
    v_all = qkv[:, 2 * n_head * d_k :]                                  # (S, H*d_v)

    head_outs = []
    for h in range(n_head):  # static unroll; n_head is small
        q = q_all[:, h * d_k : (h + 1) * d_k].astype(bf16)              # (S, d_k)
        k = k_all[:, h * d_k : (h + 1) * d_k].astype(bf16)              # (S, d_k)
        v = v_all[:, h * d_v : (h + 1) * d_v].astype(bf16)              # (S, d_v)

        # Scaled scores (scale already folded into q); contract last dims (NT).
        scores = lax.dot_general(
            q, k, (((1,), (1,)), ((), ())), preferred_element_type=f32
        )                                                               # (S, S)

        # Softmax over the key axis (torch nn.Softmax(dim=2)); exact division.
        m = jnp.max(scores, axis=-1, keepdims=True)
        e = jnp.exp(scores - m)
        attn = e / jnp.sum(e, axis=-1, keepdims=True)                   # (S, S) f32

        attn_ref[h, 0, :, :] = attn.astype(attn_ref.dtype)

        o = jnp.dot(attn.astype(bf16), v, preferred_element_type=f32)   # (S, d_v)
        head_outs.append(o.astype(bf16))

    # Concatenate heads (head order matches the reference permute/reshape) and
    # apply the output projection once.
    o_cat = jnp.concatenate(head_outs, axis=-1)                         # (S, H*d_v)
    out = jnp.dot(o_cat, wo_ref[...], preferred_element_type=f32) + bo_ref[...]
    out_ref[...] = out.astype(out_ref.dtype)


# ---------------------------------------------------------------------------
# One-time parameter preparation (hoisted out of the forward pass).
# ---------------------------------------------------------------------------
def prepare_params(params, *, n_head, d_k, d_v, d_o):
    f32 = jnp.float32
    bf16 = jnp.bfloat16
    inv_scale = jnp.asarray(1.0 / np.power(d_k, 0.5), dtype=f32)

    # Fold the back-to-back projections (x@wq then fc_q) and the 1/sqrt(d_k)
    # scale; pre-transpose PyTorch (out,in) weights so every in-kernel
    # contraction is a plain (M,K)x(K,N) dot.
    wq_f = (params["wq"] @ params["fq_w"].T) * inv_scale     # (d_x, H*d_k)
    wk_f = params["wk"] @ params["fk_w"].T                   # (d_x, H*d_k)
    wv_f = params["wv"] @ params["fv_w"].T                   # (d_x, H*d_v)
    bq = params["fq_b"] * inv_scale                          # (1, H*d_k)

    wqkv = jnp.concatenate([wq_f, wk_f, wv_f], axis=-1).astype(bf16)
    bqkv = jnp.concatenate([bq, params["fk_b"], params["fv_b"]], axis=-1).astype(f32)
    wo = params["fo_w"].T.astype(bf16)                       # (H*d_v, d_o)
    bo = params["fo_b"].astype(f32)                          # (1, d_o)
    return {"wqkv": wqkv, "bqkv": bqkv, "wo": wo, "bo": bo}


# ---------------------------------------------------------------------------
# Forward: grid=(B,), resident weights, head-major attn layout via BlockSpec.
# ---------------------------------------------------------------------------
@functools.partial(jax.jit, static_argnames=("n_head", "d_k", "d_v", "d_o"))
def self_attention_forward(x, prep, *, n_head, d_k, d_v, d_o):
    B, S, d_x = x.shape
    H = n_head
    d_qkv = prep["wqkv"].shape[1]                             # 2*H*d_k + H*d_v

    kernel = functools.partial(
        _self_attention_kernel, n_head=H, d_k=d_k, d_v=d_v
    )

    in_specs = [
        pl.BlockSpec((None, S, d_x), lambda b: (b, 0, 0)),    # x (per batch)
        pl.BlockSpec((d_x, d_qkv), lambda b: (0, 0)),         # wqkv (resident)
        pl.BlockSpec((1, d_qkv), lambda b: (0, 0)),           # bqkv (resident)
        pl.BlockSpec((H * d_v, d_o), lambda b: (0, 0)),       # wo   (resident)
        pl.BlockSpec((1, d_o), lambda b: (0, 0)),             # bo   (resident)
    ]
    out_specs = (
        pl.BlockSpec((None, S, d_o), lambda b: (b, 0, 0)),    # out
        # Head-major (H, B, S, S) -> flattens for free to (H*B, S, S).
        pl.BlockSpec((H, 1, S, S), lambda b: (0, b, 0, 0)),   # attn
    )

    out, attn = pl.pallas_call(
        kernel,
        out_shape=(
            jax.ShapeDtypeStruct((B, S, d_o), jnp.float32),
            jax.ShapeDtypeStruct((H, B, S, S), jnp.float32),
        ),
        grid=(B,),
        in_specs=in_specs,
        out_specs=out_specs,
        compiler_params=pltpu.CompilerParams(
            dimension_semantics=("parallel",),
        ),
    )(x.astype(jnp.bfloat16), prep["wqkv"], prep["bqkv"], prep["wo"], prep["bo"])

    # (H, B, S, S) -> (H*B, S, S): contiguous reshape, zero data movement.
    return out, attn.reshape(H * B, S, S)


# ---------------------------------------------------------------------------
# Parameter init mirroring the module's uniform(-1/sqrt(fan_last), +) scheme.
# ---------------------------------------------------------------------------
def init_params(key, *, n_head, d_k, d_v, d_x, d_o):
    def u(key, shape):
        stdv = 1.0 / np.power(shape[-1], 0.5)
        return jax.random.uniform(key, shape, jnp.float32, -stdv, stdv)

    keys = jax.random.split(key, 12)
    return {
        "wq": u(keys[0], (d_x, d_k)),
        "wk": u(keys[1], (d_x, d_k)),
        "wv": u(keys[2], (d_x, d_v)),
        # nn.Linear(d_k, n_head*d_k): weight (out, in), bias kept 2D (1, out).
        "fq_w": u(keys[3], (n_head * d_k, d_k)),
        "fq_b": u(keys[4], (1, n_head * d_k)),
        "fk_w": u(keys[5], (n_head * d_k, d_k)),
        "fk_b": u(keys[6], (1, n_head * d_k)),
        "fv_w": u(keys[7], (n_head * d_v, d_v)),
        "fv_b": u(keys[8], (1, n_head * d_v)),
        "fo_w": u(keys[9], (d_o, n_head * d_v)),
        "fo_b": u(keys[10], (1, d_o)),
    }


# ---------------------------------------------------------------------------
# Pure-JAX f32 reference replicating the PyTorch module exactly (no fusion).
# ---------------------------------------------------------------------------
def reference_forward(x, params, *, n_head, d_k, d_v, d_o):
    B, S, _ = x.shape
    H = n_head
    q = x @ params["wq"] @ params["fq_w"].T + params["fq_b"]
    k = x @ params["wk"] @ params["fk_w"].T + params["fk_b"]
    v = x @ params["wv"] @ params["fv_w"].T + params["fv_b"]
    # view(B,S,H,d).permute(2,0,1,3).reshape(H*B,S,d)
    qh = q.reshape(B, S, H, d_k).transpose(2, 0, 1, 3).reshape(H * B, S, d_k)
    kh = k.reshape(B, S, H, d_k).transpose(2, 0, 1, 3).reshape(H * B, S, d_k)
    vh = v.reshape(B, S, H, d_v).transpose(2, 0, 1, 3).reshape(H * B, S, d_v)
    scores = jnp.einsum("bqd,bkd->bqk", qh, kh) / np.power(d_k, 0.5)
    attn = jax.nn.softmax(scores, axis=-1)
    o = jnp.einsum("bqk,bkd->bqd", attn, vh)
    o = o.reshape(H, B, S, d_v).transpose(1, 2, 0, 3).reshape(B, S, H * d_v)
    out = o @ params["fo_w"].T + params["fo_b"]
    return out, attn


if __name__ == "__main__":
    # Small shapes consistent with the module's forward.
    batch, seq = 2, 8
    n_head, d_k, d_v, d_x, d_o = 2, 16, 16, 32, 32

    key = jax.random.PRNGKey(0)
    k_x, k_p = jax.random.split(key)
    x = jax.random.normal(k_x, (batch, seq, d_x), dtype=jnp.float32)
    params = init_params(k_p, n_head=n_head, d_k=d_k, d_v=d_v, d_x=d_x, d_o=d_o)

    # One-time weight fusion / layout prep (hoisted out of the forward pass).
    prep = prepare_params(params, n_head=n_head, d_k=d_k, d_v=d_v, d_o=d_o)
    prep = jax.block_until_ready(prep)

    output, attn = self_attention_forward(
        x, prep, n_head=n_head, d_k=d_k, d_v=d_v, d_o=d_o
    )
    jax.block_until_ready((output, attn))

    assert output.shape == (batch, seq, d_o)
    assert attn.shape == (n_head * batch, seq, seq)
    assert bool(jnp.all(jnp.isfinite(output))) and bool(jnp.all(jnp.isfinite(attn)))
    # Exact-division softmax: rows sum to 1 within f32 rounding.
    assert bool(jnp.all(jnp.abs(jnp.sum(attn, axis=-1) - 1.0) < 1e-3))

    # Parity vs. the (f32, unfused) PyTorch-equivalent reference.  bf16 MXU
    # inputs + fused weights give ~1e-3..1e-2 deviations; tolerances stated.
    out_ref, attn_ref = reference_forward(
        x, params, n_head=n_head, d_k=d_k, d_v=d_v, d_o=d_o
    )
    assert float(jnp.max(jnp.abs(attn - attn_ref))) < 5e-2
    assert float(jnp.max(jnp.abs(output - out_ref))) < 1e-1

    print("KERNEL_OK")
</pallas_src>

<mosaic_0001>
module attributes {stable_mosaic.version = 11 : i64} {
  func.func @_self_attention_kernel(%arg0: i32, %arg1: memref<1x8x32xbf16, #tpu.memory_space<vmem>>, %arg2: memref<32x96xbf16, #tpu.memory_space<vmem>>, %arg3: memref<1x96xf32, #tpu.memory_space<vmem>>, %arg4: memref<32x32xbf16, #tpu.memory_space<vmem>>, %arg5: memref<1x32xf32, #tpu.memory_space<vmem>>, %arg6: memref<1x8x32xf32, #tpu.memory_space<vmem>>, %arg7: memref<2x1x8x8xf32, #tpu.memory_space<vmem>>) attributes {dimension_semantics = [#tpu.dimension_semantics<parallel>], iteration_bounds = array<i64: 2>, scalar_prefetch = 0 : i64, scratch_operands = 0 : i64, tpu.core_type = #tpu.core_type<tc>, window_params = [{transform_indices = @transform_0, window_bounds = array<i64: 1, 8, 32>}, {pipeline_mode = #tpu.pipeline_mode<synchronous>, transform_indices = @transform_1, window_bounds = array<i64: 32, 96>}, {pipeline_mode = #tpu.pipeline_mode<synchronous>, transform_indices = @transform_2, window_bounds = array<i64: 1, 96>}, {pipeline_mode = #tpu.pipeline_mode<synchronous>, transform_indices = @transform_3, window_bounds = array<i64: 32, 32>}, {pipeline_mode = #tpu.pipeline_mode<synchronous>, transform_indices = @transform_4, window_bounds = array<i64: 1, 32>}, {transform_indices = @transform_5, window_bounds = array<i64: 1, 8, 32>}, {transform_indices = @transform_6, window_bounds = array<i64: 2, 1, 8, 8>}]} {
    %c0 = arith.constant 0 : index
    %c0_0 = arith.constant 0 : index
    %c0_1 = arith.constant 0 : index
    %0 = vector.load %arg1[%c0, %c0_0, %c0_1] : memref<1x8x32xbf16, #tpu.memory_space<vmem>>, vector<1x8x32xbf16>
    %1 = vector.shape_cast %0 : vector<1x8x32xbf16> to vector<8x32xbf16>
    %c0_2 = arith.constant 0 : index
    %c0_3 = arith.constant 0 : index
    %2 = vector.load %arg2[%c0_2, %c0_3] : memref<32x96xbf16, #tpu.memory_space<vmem>>, vector<32x96xbf16>
    %cst = arith.constant dense<0.000000e+00> : vector<8x96xf32>
    %3 = tpu.matmul %1, %2, %cst {dimension_numbers = #tpu.dot_dimension_numbers<[1], [0], [0], [1], [0, 0, 1, 1], [], []>} : vector<8x32xbf16>, vector<32x96xbf16>, vector<8x96xf32> -> vector<8x96xf32>
    %c0_4 = arith.constant 0 : index
    %c0_5 = arith.constant 0 : index
    %4 = vector.load %arg3[%c0_4, %c0_5] : memref<1x96xf32, #tpu.memory_space<vmem>>, vector<1x96xf32>
    %5 = vector.broadcast %4 : vector<1x96xf32> to vector<8x96xf32>
    %6 = arith.addf %3, %5 : vector<8x96xf32>
    %7 = vector.extract_strided_slice %6 {offsets = [0, 0], sizes = [8, 32], strides = [1, 1]} : vector<8x96xf32> to vector<8x32xf32>
    %8 = vector.extract_strided_slice %6 {offsets = [0, 32], sizes = [8, 32], strides = [1, 1]} : vector<8x96xf32> to vector<8x32xf32>
    %9 = vector.extract_strided_slice %6 {offsets = [0, 64], sizes = [8, 32], strides = [1, 1]} : vector<8x96xf32> to vector<8x32xf32>
    %10 = vector.extract_strided_slice %7 {offsets = [0, 0], sizes = [8, 16], strides = [1, 1]} : vector<8x32xf32> to vector<8x16xf32>
    %11 = arith.truncf %10 : vector<8x16xf32> to vector<8x16xbf16>
    %12 = vector.extract_strided_slice %8 {offsets = [0, 0], sizes = [8, 16], strides = [1, 1]} : vector<8x32xf32> to vector<8x16xf32>
    %13 = arith.truncf %12 : vector<8x16xf32> to vector<8x16xbf16>
    %14 = vector.extract_strided_slice %9 {offsets = [0, 0], sizes = [8, 16], strides = [1, 1]} : vector<8x32xf32> to vector<8x16xf32>
    %15 = arith.truncf %14 : vector<8x16xf32> to vector<8x16xbf16>
    %cst_6 = arith.constant dense<0.000000e+00> : vector<8x8xf32>
    %16 = tpu.matmul %11, %13, %cst_6 {dimension_numbers = #tpu.dot_dimension_numbers<[1], [1], [0], [0], [0, 0, 1, 0], [], []>} : vector<8x16xbf16>, vector<8x16xbf16>, vector<8x8xf32> -> vector<8x8xf32>
    %cst_7 = arith.constant dense<0xFF800000> : vector<8xf32>
    %17 = vector.multi_reduction <maximumf>, %16, %cst_7 [1] : vector<8x8xf32> to vector<8xf32>
    %18 = vector.shape_cast %17 : vector<8xf32> to vector<8x1xf32>
    %19 = vector.broadcast %18 : vector<8x1xf32> to vector<8x8xf32>
    %20 = arith.subf %16, %19 : vector<8x8xf32>
    %21 = math.exp %20 : vector<8x8xf32>
    %cst_8 = arith.constant dense<0.000000e+00> : vector<8xf32>
    %22 = vector.multi_reduction <add>, %21, %cst_8 [1] : vector<8x8xf32> to vector<8xf32>
    %23 = vector.shape_cast %22 : vector<8xf32> to vector<8x1xf32>
    %24 = vector.broadcast %23 : vector<8x1xf32> to vector<8x8xf32>
    %25 = arith.divf %21, %24 : vector<8x8xf32>
    %c0_9 = arith.constant 0 : index
    %c0_10 = arith.constant 0 : index
    %c0_11 = arith.constant 0 : index
    %c0_12 = arith.constant 0 : index
    %26 = vector.load %arg7[%c0_9, %c0_10, %c0_11, %c0_12] : memref<2x1x8x8xf32, #tpu.memory_space<vmem>>, vector<1x1x8x8xf32>
    %27 = vector.shape_cast %26 : vector<1x1x8x8xf32> to vector<8x8xf32>
    %28 = vector.shape_cast %25 : vector<8x8xf32> to vector<1x1x8x8xf32>
    tpu.vector_store %arg7[%c0_9, %c0_10, %c0_11, %c0_12], %28 {strides = array<i32>} : memref<2x1x8x8xf32, #tpu.memory_space<vmem>>, vector<1x1x8x8xf32>,
    %29 = arith.truncf %25 : vector<8x8xf32> to vector<8x8xbf16>
    %cst_13 = arith.constant dense<0.000000e+00> : vector<8x16xf32>
    %30 = tpu.matmul %29, %15, %cst_13 {dimension_numbers = #tpu.dot_dimension_numbers<[1], [0], [0], [1], [0, 0, 1, 1], [], []>} : vector<8x8xbf16>, vector<8x16xbf16>, vector<8x16xf32> -> vector<8x16xf32>
    %31 = arith.truncf %30 : vector<8x16xf32> to vector<8x16xbf16>
    %32 = vector.extract_strided_slice %7 {offsets = [0, 16], sizes = [8, 16], strides = [1, 1]} : vector<8x32xf32> to vector<8x16xf32>
    %33 = arith.truncf %32 : vector<8x16xf32> to vector<8x16xbf16>
    %34 = vector.extract_strided_slice %8 {offsets = [0, 16], sizes = [8, 16], strides = [1, 1]} : vector<8x32xf32> to vector<8x16xf32>
    %35 = arith.truncf %34 : vector<8x16xf32> to vector<8x16xbf16>
    %36 = vector.extract_strided_slice %9 {offsets = [0, 16], sizes = [8, 16], strides = [1, 1]} : vector<8x32xf32> to vector<8x16xf32>
    %37 = arith.truncf %36 : vector<8x16xf32> to vector<8x16xbf16>
    %cst_14 = arith.constant dense<0.000000e+00> : vector<8x8xf32>
    %38 = tpu.matmul %33, %35, %cst_14 {dimension_numbers = #tpu.dot_dimension_numbers<[1], [1], [0], [0], [0, 0, 1, 0], [], []>} : vector<8x16xbf16>, vector<8x16xbf16>, vector<8x8xf32> -> vector<8x8xf32>
    %cst_15 = arith.constant dense<0xFF800000> : vector<8xf32>
    %39 = vector.multi_reduction <maximumf>, %38, %cst_15 [1] : vector<8x8xf32> to vector<8xf32>
    %40 = vector.shape_cast %39 : vector<8xf32> to vector<8x1xf32>
    %41 = vector.broadcast %40 : vector<8x1xf32> to vector<8x8xf32>
    %42 = arith.subf %38, %41 : vector<8x8xf32>
    %43 = math.exp %42 : vector<8x8xf32>
    %cst_16 = arith.constant dense<0.000000e+00> : vector<8xf32>
    %44 = vector.multi_reduction <add>, %43, %cst_16 [1] : vector<8x8xf32> to vector<8xf32>
    %45 = vector.shape_cast %44 : vector<8xf32> to vector<8x1xf32>
    %46 = vector.broadcast %45 : vector<8x1xf32> to vector<8x8xf32>
    %47 = arith.divf %43, %46 : vector<8x8xf32>
    %c1 = arith.constant 1 : index
    %c0_17 = arith.constant 0 : index
    %c0_18 = arith.constant 0 : index
    %c0_19 = arith.constant 0 : index
    %48 = vector.load %arg7[%c1, %c0_17, %c0_18, %c0_19] : memref<2x1x8x8xf32, #tpu.memory_space<vmem>>, vector<1x1x8x8xf32>
    %49 = vector.shape_cast %48 : vector<1x1x8x8xf32> to vector<8x8xf32>
    %50 = vector.shape_cast %47 : vector<8x8xf32> to vector<1x1x8x8xf32>
    tpu.vector_store %arg7[%c1, %c0_17, %c0_18, %c0_19], %50 {strides = array<i32>} : memref<2x1x8x8xf32, #tpu.memory_space<vmem>>, vector<1x1x8x8xf32>,
    %51 = arith.truncf %47 : vector<8x8xf32> to vector<8x8xbf16>
    %cst_20 = arith.constant dense<0.000000e+00> : vector<8x16xf32>
    %52 = tpu.matmul %51, %37, %cst_20 {dimension_numbers = #tpu.dot_dimension_numbers<[1], [0], [0], [1], [0, 0, 1, 1], [], []>} : vector<8x8xbf16>, vector<8x16xbf16>, vector<8x16xf32> -> vector<8x16xf32>
    %53 = arith.truncf %52 : vector<8x16xf32> to vector<8x16xbf16>
    %54 = tpu.concatenate %31, %53 in 1 : vector<8x16xbf16>, vector<8x16xbf16> -> vector<8x32xbf16>
    %c0_21 = arith.constant 0 : index
    %c0_22 = arith.constant 0 : index
    %55 = vector.load %arg4[%c0_21, %c0_22] : memref<32x32xbf16, #tpu.memory_space<vmem>>, vector<32x32xbf16>
    %cst_23 = arith.constant dense<0.000000e+00> : vector<8x32xf32>
    %56 = tpu.matmul %54, %55, %cst_23 {dimension_numbers = #tpu.dot_dimension_numbers<[1], [0], [0], [1], [0, 0, 1, 1], [], []>} : vector<8x32xbf16>, vector<32x32xbf16>, vector<8x32xf32> -> vector<8x32xf32>
    %c0_24 = arith.constant 0 : index
    %c0_25 = arith.constant 0 : index
    %57 = vector.load %arg5[%c0_24, %c0_25] : memref<1x32xf32, #tpu.memory_space<vmem>>, vector<1x32xf32>
    %58 = vector.broadcast %57 : vector<1x32xf32> to vector<8x32xf32>
    %59 = arith.addf %56, %58 : vector<8x32xf32>
    %c0_26 = arith.constant 0 : index
    %c0_27 = arith.constant 0 : index
    %c0_28 = arith.constant 0 : index
    %60 = vector.load %arg6[%c0_26, %c0_27, %c0_28] : memref<1x8x32xf32, #tpu.memory_space<vmem>>, vector<1x8x32xf32>
    %61 = vector.shape_cast %60 : vector<1x8x32xf32> to vector<8x32xf32>
    %62 = vector.shape_cast %59 : vector<8x32xf32> to vector<1x8x32xf32>
    tpu.vector_store %arg6[%c0_26, %c0_27, %c0_28], %62 {strides = array<i32>} : memref<1x8x32xf32, #tpu.memory_space<vmem>>, vector<1x8x32xf32>,
    return
  }
  func.func @transform_0(%arg0: i32) -> (i32, i32, i32) {
    %c0_i32 = arith.constant 0 : i32
    %c0_i32_0 = arith.constant 0 : i32
    %c0_i32_1 = arith.constant 0 : i32
    return %arg0, %c0_i32, %c0_i32_0 : i32, i32, i32
  }
  func.func @transform_1(%arg0: i32) -> (i32, i32) {
    %c0_i32 = arith.constant 0 : i32
    %c0_i32_0 = arith.constant 0 : i32
    %c0_i32_1 = arith.constant 0 : i32
    return %c0_i32, %c0_i32_0 : i32, i32
  }
  func.func @transform_2(%arg0: i32) -> (i32, i32) {
    %c0_i32 = arith.constant 0 : i32
    %c0_i32_0 = arith.constant 0 : i32
    %c0_i32_1 = arith.constant 0 : i32
    return %c0_i32, %c0_i32_0 : i32, i32
  }
  func.func @transform_3(%arg0: i32) -> (i32, i32) {
    %c0_i32 = arith.constant 0 : i32
    %c0_i32_0 = arith.constant 0 : i32
    %c0_i32_1 = arith.constant 0 : i32
    return %c0_i32, %c0_i32_0 : i32, i32
  }
  func.func @transform_4(%arg0: i32) -> (i32, i32) {
    %c0_i32 = arith.constant 0 : i32
    %c0_i32_0 = arith.constant 0 : i32
    %c0_i32_1 = arith.constant 0 : i32
    return %c0_i32, %c0_i32_0 : i32, i32
  }
  func.func @transform_5(%arg0: i32) -> (i32, i32, i32) {
    %c0_i32 = arith.constant 0 : i32
    %c0_i32_0 = arith.constant 0 : i32
    %c0_i32_1 = arith.constant 0 : i32
    return %arg0, %c0_i32, %c0_i32_0 : i32, i32, i32
  }
  func.func @transform_6(%arg0: i32) -> (i32, i32, i32, i32) {
    %c0_i32 = arith.constant 0 : i32
    %c0_i32_0 = arith.constant 0 : i32
    %c0_i32_1 = arith.constant 0 : i32
    %c0_i32_2 = arith.constant 0 : i32
    return %c0_i32, %arg0, %c0_i32_0, %c0_i32_1 : i32, i32, i32, i32
  }
}

</mosaic_0001>

<llo_original>
// kernel: self_attention_forward.1
$region0: #{self_attention_forward.1}
  #allocation0 [shape = 'u32[]', space=smem, size = 0x4, offset = 0x4, fixed_abs, tag = 'smem constant byte address 0x4 - core index']
  #allocation1 [shape = 'u32[144,128]{1,0:T(1,128)}', space=vmem, size = 0x12000, scoped, tag = 'internal scratch']
  %s0 = inlined_call_operand.vmem [shape: bf16[2,8,32], index: 0, kind: input, shape index: {}]
  %s1 = inlined_call_operand.vmem [shape: bf16[32,96], index: 1, kind: input, shape index: {}]
  %s2 = inlined_call_operand.vmem [shape: f32[1,96], index: 2, kind: input, shape index: {}]
  %s3 = inlined_call_operand.vmem [shape: bf16[32,32], index: 3, kind: input, shape index: {}]
  %s4 = inlined_call_operand.vmem [shape: f32[1,32], index: 4, kind: input, shape index: {}]
  %s5 = inlined_call_operand.hbm [shape: f32[2,8,32], index: 5, kind: output, shape index: {0}]
  %s6 = inlined_call_operand.hbm [shape: f32[2,2,8,8], index: 6, kind: output, shape index: {1}]
  %7 = xla_tuple %s5, %s6
  %s8 = sld [smem:[#allocation0]]
  $region61: #{self_attention_forward.1} parent=0
    _
  %s10 = ssub.s32 1, %s8
  %s11 = scalar_select 0, %s10, %s8
  $region1: #{self_attention_forward.1} parent=0
    #allocation2 [shape = 'u8[8192]{0}', space=vmem, size = 0x2000, scoped, tag = 'output window, operand 0']
    #allocation3 [shape = 's32[2]{0}', space=sflag, size = 0x8, scoped, tag = 'scoped memory for self_attention_forward.1']
    #allocation4 [shape = 'u8[16384]{0}', space=vmem, size = 0x4000, scoped, tag = 'output window, operand 1']
    #allocation5 [shape = 's32[2]{0}', space=sflag, size = 0x8, scoped, tag = 'scoped memory for self_attention_forward.1']
    %12 = vsyncpa [#allocation3], 0
    %s13 = scalar_lea.sflag [#allocation3], 1
    %14 = vsyncpa %s13, 0
    %15 = vsyncpa [#allocation5], 0
    %s16 = scalar_lea.sflag [#allocation5], 1
    %17 = vsyncpa %s16, 0
    loop: start=0, step=1, limit=4
    $region2: #{self_attention_forward.1} parent=1 // loop_pre_header
      _
    $region3: #{self_attention_forward.1} parent=1 // loop_header
      %s19 = sphi 0, %s23
      %p20 = scmp.ge.s32.totalorder %s19, 4
      %s29 = sphi 0, %s31
      %s32 = sphi 0, %s29
      %s33 = sphi 0, %s32
      %s49 = sphi 0, %s33
      %s53 = sphi 0, %s53
      %s55 = sphi 0, %s53
      %s56 = sphi 0, %s55
      %s70 = sphi 0, %s56
      %s74 = sphi 0, %s74
      %s76 = sphi 0, %s74
      %s77 = sphi 0, %s76
      %s91 = sphi 0, %s77
      %s95 = sphi 0, %s95
      %s97 = sphi 0, %s95
      %s98 = sphi 0, %s97
      %s112 = sphi 0, %s98
      %s116 = sphi 0, %s116
      %s118 = sphi 0, %s116
      %s119 = sphi 0, %s118
      %s133 = sphi 0, %s119
      %s139 = sphi 0, %s141
      %s142 = sphi 0, %s139
      %s143 = sphi 0, %s142
      %s159 = sphi 0, %s143
      %s165 = sphi 0, %s167
      %s168 = sphi 0, %s165
      %s169 = sphi 0, %s168
      %s185 = sphi 0, %s169
    $region4: #{self_attention_forward.1} parent=1 // loop_header_branch
      %22 = sbr.rel (%p20) target = $region8
    $region5: #{self_attention_forward.1} parent=1 // loop_body
      %s24 = ssub.s32 %s19, 1
      %s25 = ssub.s32 %s19, 2
      %s26 = sadd.s32 %s19, 1
      %s27 = ssub.s32 %s19, %s26
      %p28 = scmp.eq.s32.totalorder %s27, 0
      %s30 = sadd.s32 %s29, 1
      %s31 = scalar_select %p28, %s29, %s30
      %p34 = pneg %p28
      %p35 = scmp.eq.s32.totalorder %s19, 1
      %p36 = por %p34, %p35
      %p37 = scmp.ne.s32.totalorder %s29, %s32
      %p38 = scmp.eq.s32.totalorder %s19, 0
      %p39 = por %p37, %p38
      %p40 = scmp.ne.s32.totalorder %s29, %s32
      %p41 = scmp.eq.s32.totalorder %s24, 1
      %p42 = por %p40, %p41
      %p43 = scmp.ne.s32.totalorder %s32, %s33
      %p44 = scmp.eq.s32.totalorder %s24, 0
      %p45 = por %p43, %p44
      %p46 = scmp.ne.s32.totalorder %s32, %s33
      %p47 = scmp.eq.s32.totalorder %s25, 1
      %p48 = por %p46, %p47
      %p50 = scmp.ne.s32.totalorder %s33, %s49
      %p51 = scmp.eq.s32.totalorder %s25, 0
      %p52 = por %p50, %p51
      %s54 = sadd.s32 %s53, 1
      %p57 = scmp.eq.s32.totalorder %s19, 1
      %p58 = scmp.ne.s32.totalorder %s53, %s55
      %p59 = scmp.eq.s32.totalorder %s19, 0
      %p60 = por %p58, %p59
      %p61 = scmp.ne.s32.totalorder %s53, %s55
      %p62 = scmp.eq.s32.totalorder %s24, 1
      %p63 = por %p61, %p62
      %p64 = scmp.ne.s32.totalorder %s55, %s56
      %p65 = scmp.eq.s32.totalorder %s24, 0
      %p66 = por %p64, %p65
      %p67 = scmp.ne.s32.totalorder %s55, %s56
      %p68 = scmp.eq.s32.totalorder %s25, 1
      %p69 = por %p67, %p68
      %p71 = scmp.ne.s32.totalorder %s56, %s70
      %p72 = scmp.eq.s32.totalorder %s25, 0
      %p73 = por %p71, %p72
      %s75 = sadd.s32 %s74, 1
      %p78 = scmp.eq.s32.totalorder %s19, 1
      %p79 = scmp.ne.s32.totalorder %s74, %s76
      %p80 = scmp.eq.s32.totalorder %s19, 0
      %p81 = por %p79, %p80
      %p82 = scmp.ne.s32.totalorder %s74, %s76
      %p83 = scmp.eq.s32.totalorder %s24, 1
      %p84 = por %p82, %p83
      %p85 = scmp.ne.s32.totalorder %s76, %s77
      %p86 = scmp.eq.s32.totalorder %s24, 0
      %p87 = por %p85, %p86
      %p88 = scmp.ne.s32.totalorder %s76, %s77
      %p89 = scmp.eq.s32.totalorder %s25, 1
      %p90 = por %p88, %p89
      %p92 = scmp.ne.s32.totalorder %s77, %s91
      %p93 = scmp.eq.s32.totalorder %s25, 0
      %p94 = por %p92, %p93
      %s96 = sadd.s32 %s95, 1
      %p99 = scmp.eq.s32.totalorder %s19, 1
      %p100 = scmp.ne.s32.totalorder %s95, %s97
      %p101 = scmp.eq.s32.totalorder %s19, 0
      %p102 = por %p100, %p101
      %p103 = scmp.ne.s32.totalorder %s95, %s97
      %p104 = scmp.eq.s32.totalorder %s24, 1
      %p105 = por %p103, %p104
      %p106 = scmp.ne.s32.totalorder %s97, %s98
      %p107 = scmp.eq.s32.totalorder %s24, 0
      %p108 = por %p106, %p107
      %p109 = scmp.ne.s32.totalorder %s97, %s98
      %p110 = scmp.eq.s32.totalorder %s25, 1
      %p111 = por %p109, %p110
      %p113 = scmp.ne.s32.totalorder %s98, %s112
      %p114 = scmp.eq.s32.totalorder %s25, 0
      %p115 = por %p113, %p114
      %s117 = sadd.s32 %s116, 1
      %p120 = scmp.eq.s32.totalorder %s19, 1
      %p121 = scmp.ne.s32.totalorder %s116, %s118
      %p122 = scmp.eq.s32.totalorder %s19, 0
      %p123 = por %p121, %p122
      %p124 = scmp.ne.s32.totalorder %s116, %s118
      %p125 = scmp.eq.s32.totalorder %s24, 1
      %p126 = por %p124, %p125
      %p127 = scmp.ne.s32.totalorder %s118, %s119
      %p128 = scmp.eq.s32.totalorder %s24, 0
      %p129 = por %p127, %p128
      %p130 = scmp.ne.s32.totalorder %s118, %s119
      %p131 = scmp.eq.s32.totalorder %s25, 1
      %p132 = por %p130, %p131
      %p134 = scmp.ne.s32.totalorder %s119, %s133
      %p135 = scmp.eq.s32.totalorder %s25, 0
      %p136 = por %p134, %p135
      %s137 = ssub.s32 %s19, %s26
      %p138 = scmp.eq.s32.totalorder %s137, 0
      %s140 = sadd.s32 %s139, 1
      %s141 = scalar_select %p138, %s139, %s140
      %p144 = pneg %p138
      %p145 = scmp.eq.s32.totalorder %s19, 1
      %p146 = por %p144, %p145
      %p147 = scmp.ne.s32.totalorder %s139, %s142
      %p148 = scmp.eq.s32.totalorder %s19, 0
      %p149 = por %p147, %p148
      %p150 = scmp.ne.s32.totalorder %s139, %s142
      %p151 = scmp.eq.s32.totalorder %s24, 1
      %p152 = por %p150, %p151
      %p153 = scmp.ne.s32.totalorder %s142, %s143
      %p154 = scmp.eq.s32.totalorder %s24, 0
      %p155 = por %p153, %p154
      %p156 = scmp.ne.s32.totalorder %s142, %s143
      %p157 = scmp.eq.s32.totalorder %s25, 1
      %p158 = por %p156, %p157
      %p160 = scmp.ne.s32.totalorder %s143, %s159
      %p161 = scmp.eq.s32.totalorder %s25, 0
      %p162 = por %p160, %p161
      %s163 = ssub.s32 %s19, %s26
      %p164 = scmp.eq.s32.totalorder %s163, 0
      %s166 = sadd.s32 %s165, 1
      %s167 = scalar_select %p164, %s165, %s166
      %p170 = pneg %p164
      %p171 = scmp.eq.s32.totalorder %s19, 1
      %p172 = por %p170, %p171
      %p173 = scmp.ne.s32.totalorder %s165, %s168
      %p174 = scmp.eq.s32.totalorder %s19, 0
      %p175 = por %p173, %p174
      %p176 = scmp.ne.s32.totalorder %s165, %s168
      %p177 = scmp.eq.s32.totalorder %s24, 1
      %p178 = por %p176, %p177
      %p179 = scmp.ne.s32.totalorder %s168, %s169
      %p180 = scmp.eq.s32.totalorder %s24, 0
      %p181 = por %p179, %p180
      %p182 = scmp.ne.s32.totalorder %s168, %s169
      %p183 = scmp.eq.s32.totalorder %s25, 1
      %p184 = por %p182, %p183
      %p186 = scmp.ne.s32.totalorder %s169, %s185
      %p187 = scmp.eq.s32.totalorder %s25, 0
      %p188 = por %p186, %p187
      %p189 = scmp.le.s32.totalorder 1, %s19
      %p190 = scmp.lt.s32.totalorder %s19, 3
      %p191 = pnand %p189, %p190
      %p192 = pneg %p191
      // Predicated region
      $region9: #{self_attention_forward.1} parent=5 // pred_check
        _
      $region10: #{self_attention_forward.1} parent=5 // pred_check_branch
        %194 = sbr.rel (%p191) target = $region12
      $region11: #{self_attention_forward.1} parent=5 // pred_region
        %s195 = ssub.s32 %s19, 1
        // Predicated region
        $region13: #{self_attention_forward.1} parent=11 // pred_check
          %p196 = pneg %p66
        $region14: #{self_attention_forward.1} parent=11 // pred_check_branch
          %198 = sbr.rel (%p196) target = $region16
        $region15: #{self_attention_forward.1} parent=11 // pred_region
          _
        $region16: #{self_attention_forward.1} parent=11 // pred_fallthru
          _
        // Predicated region
        $region17: #{self_attention_forward.1} parent=11 // pred_check
          %p199 = pneg %p87
        $region18: #{self_attention_forward.1} parent=11 // pred_check_branch
          %201 = sbr.rel (%p199) target = $region20
        $region19: #{self_attention_forward.1} parent=11 // pred_region
          _
        $region20: #{self_attention_forward.1} parent=11 // pred_fallthru
          _
        // Predicated region
        $region21: #{self_attention_forward.1} parent=11 // pred_check
          %p202 = pneg %p108
        $region22: #{self_attention_forward.1} parent=11 // pred_check_branch
          %204 = sbr.rel (%p202) target = $region24
        $region23: #{self_attention_forward.1} parent=11 // pred_region
          _
        $region24: #{self_attention_forward.1} parent=11 // pred_fallthru
          _
        // Predicated region
        $region25: #{self_attention_forward.1} parent=11 // pred_check
          %p205 = pneg %p129
        $region26: #{self_attention_forward.1} parent=11 // pred_check_branch
          %207 = sbr.rel (%p205) target = $region28
        $region27: #{self_attention_forward.1} parent=11 // pred_region
          _
        $region28: #{self_attention_forward.1} parent=11 // pred_fallthru
          _
      $region12: #{self_attention_forward.1} parent=5 // pred_fallthru
        _
      %p208 = scmp.lt.s32.totalorder %s19, 2
      // Predicated region
      $region29: #{self_attention_forward.1} parent=5 // pred_check
        %p209 = pneg %p208
      $region30: #{self_attention_forward.1} parent=5 // pred_check_branch
        %211 = sbr.rel (%p209) target = $region32
      $region31: #{self_attention_forward.1} parent=5 // pred_region
        // Predicated region
        $region33: #{self_attention_forward.1} parent=31 // pred_check
          %p212 = pneg %p39
        $region34: #{self_attention_forward.1} parent=31 // pred_check_branch
          %214 = sbr.rel (%p212) target = $region36
        $region35: #{self_attention_forward.1} parent=31 // pred_region
          %p215 = scmp.lt.s32.totalorder %s19, 1
          %s216 = scalar_select %p215, %s19, 1
          %s217 = smul.addr %s216, 4
          %s218 = scalar_lea.vmem %s0, %s217
        $region36: #{self_attention_forward.1} parent=31 // pred_fallthru
          _
      $region32: #{self_attention_forward.1} parent=5 // pred_fallthru
        _
      %p219 = scmp.le.s32.totalorder 1, %s19
      %p220 = scmp.lt.s32.totalorder %s19, 3
      %p221 = pnand %p219, %p220
      %p222 = pneg %p221
      // Predicated region
      $region37: #{self_attention_forward.1} parent=5 // pred_check
        _
      $region38: #{self_attention_forward.1} parent=5 // pred_check_branch
        %224 = sbr.rel (%p221) target = $region40
      $region39: #{self_attention_forward.1} parent=5 // pred_region
        %s225 = ssub.s32 %s19, 1
        %p226 = scmp.lt.s32.totalorder %s24, 1
        %s227 = scalar_select %p226, %s24, 1
        %s228 = smul.addr %s227, 4
        %s229 = scalar_lea.vmem %s0, %s228
        %p230 = pneg %p45
        %p231 = pneg %p42
        %p232 = pneg %p66
        %p233 = pneg %p63
        %p234 = pneg %p87
        %p235 = pneg %p84
        %p236 = pneg %p108
        %p237 = pneg %p105
        %p238 = pneg %p129
        %p239 = pneg %p126
        %p240 = pneg %p155
        %p241 = pneg %p152
        %s242 = sand.u32 %s142, 1
        %s243 = scalar_lea.sflag [#allocation3], %s242
        %s244 = sand.u32 %s142, 1
        %s245 = smul.addr %s244, 8
        %s246 = scalar_lea.vmem [#allocation2], %s245
        %p247 = pneg %p181
        %p248 = pneg %p178
        %s249 = sand.u32 %s168, 1
        %s250 = scalar_lea.sflag [#allocation5], %s249
        %s251 = sand.u32 %s168, 1
        %s252 = smul.addr %s251, 16
        %s253 = scalar_lea.vmem [#allocation4], %s252
        %p254 = scmp.lt.s32.totalorder %s24, 1
        %s255 = scalar_select %p254, %s24, 1
        %s256 = smul.addr %s255, 4
        %s257 = scalar_lea.vmem %s0, %s256
        %v259 = vld [vmem:[%s257] sm:$0xf]
        %v260 = vld [vmem:[%s1] sm:$0xf]
        %v261 = vld [vmem:[%s1 + $0x4] sm:$0xf]
        %v262 = vld [vmem:[%s1 + $0x8] sm:$0xf]
        %v263 = vld [vmem:[%s1 + $0xc] sm:$0xf]
        %v264 = vld [vmem:[%s2] sm:$0x1]
        %v266 = vlaneseq
        %v267 = vshrl.u32 %v266, 7
        %v268 = vsub.s32 0, %v267
        %v269 = vrot.slane %v264, %v268
        %v275 = vunpack.c.l.b16 %v260
        %v276 = vunpack.c.l.b16 %v261
        %v277 = vunpack.c.l.b16 %v262
        %v278 = vunpack.c.l.b16 %v263
        %v279 = vpack.c.b16 %v276, %v275
        %v280 = vpack.c.b16 %v278, %v277
        %vm283 = vcmask 261120
        %v285 = vsel %vm283, %v259, 0
        %287 = vmatprep.subr.bf16.mxu0 0
        %288 = vmatpush1.bf16.msra.mxu0 %v279
        %289 = vmatprep.subr.bf16.mxu0 0
        %290 = vmatpush1.bf16.msra.mxu0 %v280
        %291 = vmatprep.subr.bf16.mxu0 0
        %292 = vmatpush1.bf16.msra.mxu0 0
        %293 = vmatprep.subr.bf16.mxu0 0
        %294 = vmatpush1.bf16.msra.mxu0 0
        %295 = vmatprep.subr.bf16.mxu0 0
        %296 = vmatpush1.bf16.msra.mxu0 0
        %297 = vmatprep.subr.bf16.mxu0 0
        %298 = vmatpush1.bf16.msra.mxu0 0
        %299 = vmatprep.subr.bf16.mxu0 0
        %300 = vmatpush1.bf16.msra.mxu0 0
        %301 = vmatprep.subr.bf16.mxu0 0
        %302 = vmatpush1.bf16.msra.mxu0 0
        %303 = vmatprep.subr.bf16.mxu0 0
        %304 = vmatpush1.bf16.msra.mxu0 0
        %305 = vmatprep.subr.bf16.mxu0 0
        %306 = vmatpush1.bf16.msra.mxu0 0
        %307 = vmatprep.subr.bf16.mxu0 0
        %308 = vmatpush1.bf16.msra.mxu0 0
        %309 = vmatprep.subr.bf16.mxu0 0
        %310 = vmatpush1.bf16.msra.mxu0 0
        %311 = vmatprep.subr.bf16.mxu0 0
        %312 = vmatpush1.bf16.msra.mxu0 0
        %313 = vmatprep.subr.bf16.mxu0 0
        %314 = vmatpush1.bf16.msra.mxu0 0
        %315 = vmatprep.subr.bf16.mxu0 0
        %316 = vmatpush1.bf16.msra.mxu0 0
        %317 = vmatprep.subr.bf16.mxu0 0
        %318 = vmatpush1.bf16.msra.mxu0 0
        %319 = vmatprep.mubr.bf16.mxu0 0
        %320 = vmatmul.mubr.bf16.gmra.mrb[0].mxu0 %v285
        %v321 = vpop.f32.mrb[0].mxu0
        %v322 = vadd.f32 %v269, %v321
        %v323 = vpop.f32.mrb[0].mxu0
        %v324 = vpop.f32.mrb[0].mxu0
        %v325 = vpop.f32.mrb[0].mxu0
        %326 = vdwg.mxu0
        %v327 = vpack.c.bf16 %v322, %v322
        %329 = vrot.lane.b32.xlu0 %v327, 96
        %v330 = vpop.permute.xlu0 %329
        %vm331 = vcmask 130048
        %v333 = vsel %vm331, %v327, 0
        %v336 = vsel %vm331, %v330, 0
        %338 = vmatprep.subr.bf16.mxu0 0
        %339 = vmatpush1.bf16.xpose.msra.mxu0 %v336
        %340 = vmatprep.subr.bf16.mxu0 0
        %341 = vmatpush1.bf16.xpose.msra.mxu0 0
        %342 = vmatprep.subr.bf16.mxu0 0
        %343 = vmatpush1.bf16.xpose.msra.mxu0 0
        %344 = vmatprep.subr.bf16.mxu0 0
        %345 = vmatpush1.bf16.xpose.msra.mxu0 0
        %346 = vmatprep.subr.bf16.mxu0 0
        %347 = vmatpush1.bf16.xpose.msra.mxu0 0
        %348 = vmatprep.subr.bf16.mxu0 0
        %349 = vmatpush1.bf16.xpose.msra.mxu0 0
        %350 = vmatprep.subr.bf16.mxu0 0
        %351 = vmatpush1.bf16.xpose.msra.mxu0 0
        %352 = vmatprep.subr.bf16.mxu0 0
        %353 = vmatpush1.bf16.xpose.msra.mxu0 0
        %354 = vmatprep.subr.bf16.mxu0 0
        %355 = vmatpush1.bf16.xpose.msra.mxu0 0
        %356 = vmatprep.subr.bf16.mxu0 0
        %357 = vmatpush1.bf16.xpose.msra.mxu0 0
        %358 = vmatprep.subr.bf16.mxu0 0
        %359 = vmatpush1.bf16.xpose.msra.mxu0 0
        %360 = vmatprep.subr.bf16.mxu0 0
        %361 = vmatpush1.bf16.xpose.msra.mxu0 0
        %362 = vmatprep.subr.bf16.mxu0 0
        %363 = vmatpush1.bf16.xpose.msra.mxu0 0
        %364 = vmatprep.subr.bf16.mxu0 0
        %365 = vmatpush1.bf16.xpose.msra.mxu0 0
        %366 = vmatprep.subr.bf16.mxu0 0
        %367 = vmatpush1.bf16.xpose.msra.mxu0 0
        %368 = vmatprep.subr.bf16.mxu0 0
        %369 = vmatpush1.bf16.xpose.msra.mxu0 0
        %370 = vmatprep.mubr.bf16.mxu0 0
        %371 = vmatmul.mubr.bf16.gmra.mrb[0].mxu0 %v333
        %v372 = vpop.f32.mrb[0].mxu0
        %v373 = vadd.f32 0.0, %v372
        %v374 = vpop.f32.mrb[0].mxu0
        %v375 = vpop.f32.mrb[0].mxu0
        %v376 = vpop.f32.mrb[0].mxu0
        %377 = vdwg.mxu0
        %vm378 = vcmask 64512
        %v379 = vsel %vm378, %v373, -inf
        %380 = vmax.xlane.f32.xlu0 %v379
        %v381 = vpop.xlane.xlu0 %380
        %v382 = vsub.f32 %v373, %v381
        %v383 = vmul.f32 %v382, 1.442695
        %v384 = vpow.pop %v383
        %v385 = vsel %vm378, %v384, 0.0
        %386 = vadd.xlane.f32.xlu0 %v385
        %v387 = vpop.xlane.xlu0 %386
        %v388 = vrcp.pop %v387
        %v389 = vmul.f32 %v384, %v388
        %390 = vst.msk [vmem:[%s253] sm:$0xff] %vm378, %v389
        %v391 = vpack.c.bf16 %v389, %v389
        %392 = vrot.lane.b32.xlu0 %v327, 64
        %v393 = vpop.permute.xlu0 %392
        %v395 = vsel %vm378, %v391, 0
        %vm397 = vcmask 1043456
        %v399 = vsel %vm397, %v393, 0
        %401 = vmatprep.subr.bf16.mxu0 0
        %402 = vmatpush1.bf16.msra.mxu0 %v399
        %403 = vmatprep.subr.bf16.mxu0 0
        %404 = vmatpush1.bf16.msra.mxu0 0
        %405 = vmatprep.subr.bf16.mxu0 0
        %406 = vmatpush1.bf16.msra.mxu0 0
        %407 = vmatprep.subr.bf16.mxu0 0
        %408 = vmatpush1.bf16.msra.mxu0 0
        %409 = vmatprep.subr.bf16.mxu0 0
        %410 = vmatpush1.bf16.msra.mxu0 0
        %411 = vmatprep.subr.bf16.mxu0 0
        %412 = vmatpush1.bf16.msra.mxu0 0
        %413 = vmatprep.subr.bf16.mxu0 0
        %414 = vmatpush1.bf16.msra.mxu0 0
        %415 = vmatprep.subr.bf16.mxu0 0
        %416 = vmatpush1.bf16.msra.mxu0 0
        %417 = vmatprep.subr.bf16.mxu0 0
        %418 = vmatpush1.bf16.msra.mxu0 0
        %419 = vmatprep.subr.bf16.mxu0 0
        %420 = vmatpush1.bf16.msra.mxu0 0
        %421 = vmatprep.subr.bf16.mxu0 0
        %422 = vmatpush1.bf16.msra.mxu0 0
        %423 = vmatprep.subr.bf16.mxu0 0
        %424 = vmatpush1.bf16.msra.mxu0 0
        %425 = vmatprep.subr.bf16.mxu0 0
        %426 = vmatpush1.bf16.msra.mxu0 0
        %427 = vmatprep.subr.bf16.mxu0 0
        %428 = vmatpush1.bf16.msra.mxu0 0
        %429 = vmatprep.subr.bf16.mxu0 0
        %430 = vmatpush1.bf16.msra.mxu0 0
        %431 = vmatprep.subr.bf16.mxu0 0
        %432 = vmatpush1.bf16.msra.mxu0 0
        %433 = vmatprep.mubr.bf16.mxu0 0
        %434 = vmatmul.mubr.bf16.gmra.mrb[0].mxu0 %v395
        %v435 = vpop.f32.mrb[0].mxu0
        %v436 = vadd.f32 0.0, %v435
        %v437 = vpop.f32.mrb[0].mxu0
        %v438 = vpop.f32.mrb[0].mxu0
        %v439 = vpop.f32.mrb[0].mxu0
        %440 = vdwg.mxu0
        %v441 = vpack.c.bf16 %v436, %v436
        %442 = vrot.lane.b32.xlu0 %v327, 112
        %v443 = vpop.permute.xlu0 %442
        %444 = vrot.lane.b32.xlu0 %v327, 80
        %v445 = vpop.permute.xlu0 %444
        %v447 = vsel %vm331, %v443, 0
        %v450 = vsel %vm331, %v445, 0
        %452 = vmatprep.subr.bf16.mxu0 0
        %453 = vmatpush1.bf16.xpose.msra.mxu0 %v450
        %454 = vmatprep.subr.bf16.mxu0 0
        %455 = vmatpush1.bf16.xpose.msra.mxu0 0
        %456 = vmatprep.subr.bf16.mxu0 0
        %457 = vmatpush1.bf16.xpose.msra.mxu0 0
        %458 = vmatprep.subr.bf16.mxu0 0
        %459 = vmatpush1.bf16.xpose.msra.mxu0 0
        %460 = vmatprep.subr.bf16.mxu0 0
        %461 = vmatpush1.bf16.xpose.msra.mxu0 0
        %462 = vmatprep.subr.bf16.mxu0 0
        %463 = vmatpush1.bf16.xpose.msra.mxu0 0
        %464 = vmatprep.subr.bf16.mxu0 0
        %465 = vmatpush1.bf16.xpose.msra.mxu0 0
        %466 = vmatprep.subr.bf16.mxu0 0
        %467 = vmatpush1.bf16.xpose.msra.mxu0 0
        %468 = vmatprep.subr.bf16.mxu0 0
        %469 = vmatpush1.bf16.xpose.msra.mxu0 0
        %470 = vmatprep.subr.bf16.mxu0 0
        %471 = vmatpush1.bf16.xpose.msra.mxu0 0
        %472 = vmatprep.subr.bf16.mxu0 0
        %473 = vmatpush1.bf16.xpose.msra.mxu0 0
        %474 = vmatprep.subr.bf16.mxu0 0
        %475 = vmatpush1.bf16.xpose.msra.mxu0 0
        %476 = vmatprep.subr.bf16.mxu0 0
        %477 = vmatpush1.bf16.xpose.msra.mxu0 0
        %478 = vmatprep.subr.bf16.mxu0 0
        %479 = vmatpush1.bf16.xpose.msra.mxu0 0
        %480 = vmatprep.subr.bf16.mxu0 0
        %481 = vmatpush1.bf16.xpose.msra.mxu0 0
        %482 = vmatprep.subr.bf16.mxu0 0
        %483 = vmatpush1.bf16.xpose.msra.mxu0 0
        %484 = vmatprep.mubr.bf16.mxu0 0
        %485 = vmatmul.mubr.bf16.gmra.mrb[0].mxu0 %v447
        %v486 = vpop.f32.mrb[0].mxu0
        %v487 = vadd.f32 0.0, %v486
        %v488 = vpop.f32.mrb[0].mxu0
        %v489 = vpop.f32.mrb[0].mxu0
        %v490 = vpop.f32.mrb[0].mxu0
        %491 = vdwg.mxu0
        %v492 = vsel %vm378, %v487, -inf
        %493 = vmax.xlane.f32.xlu0 %v492
        %v494 = vpop.xlane.xlu0 %493
        %v495 = vsub.f32 %v487, %v494
        %v496 = vmul.f32 %v495, 1.442695
        %v497 = vpow.pop %v496
        %v498 = vsel %vm378, %v497, 0.0
        %499 = vadd.xlane.f32.xlu0 %v498
        %v500 = vpop.xlane.xlu0 %499
        %v501 = vrcp.pop %v500
        %v502 = vmul.f32 %v497, %v501
        %s503 = scalar_lea.vmem %s253, 8 [#allocation4]
        %504 = vst.msk [vmem:[%s503] sm:$0xff] %vm378, %v502
        %v505 = vpack.c.bf16 %v502, %v502
        %506 = vrot.lane.b32.xlu0 %v327, 48
        %v507 = vpop.permute.xlu0 %506
        %v509 = vsel %vm378, %v505, 0
        %v512 = vsel %vm397, %v507, 0
        %514 = vmatprep.subr.bf16.mxu0 0
        %515 = vmatpush1.bf16.msra.mxu0 %v512
        %516 = vmatprep.subr.bf16.mxu0 0
        %517 = vmatpush1.bf16.msra.mxu0 0
        %518 = vmatprep.subr.bf16.mxu0 0
        %519 = vmatpush1.bf16.msra.mxu0 0
        %520 = vmatprep.subr.bf16.mxu0 0
        %521 = vmatpush1.bf16.msra.mxu0 0
        %522 = vmatprep.subr.bf16.mxu0 0
        %523 = vmatpush1.bf16.msra.mxu0 0
        %524 = vmatprep.subr.bf16.mxu0 0
        %525 = vmatpush1.bf16.msra.mxu0 0
        %526 = vmatprep.subr.bf16.mxu0 0
        %527 = vmatpush1.bf16.msra.mxu0 0
        %528 = vmatprep.subr.bf16.mxu0 0
        %529 = vmatpush1.bf16.msra.mxu0 0
        %530 = vmatprep.subr.bf16.mxu0 0
        %531 = vmatpush1.bf16.msra.mxu0 0
        %532 = vmatprep.subr.bf16.mxu0 0
        %533 = vmatpush1.bf16.msra.mxu0 0
        %534 = vmatprep.subr.bf16.mxu0 0
        %535 = vmatpush1.bf16.msra.mxu0 0
        %536 = vmatprep.subr.bf16.mxu0 0
        %537 = vmatpush1.bf16.msra.mxu0 0
        %538 = vmatprep.subr.bf16.mxu0 0
        %539 = vmatpush1.bf16.msra.mxu0 0
        %540 = vmatprep.subr.bf16.mxu0 0
        %541 = vmatpush1.bf16.msra.mxu0 0
        %542 = vmatprep.subr.bf16.mxu0 0
        %543 = vmatpush1.bf16.msra.mxu0 0
        %544 = vmatprep.subr.bf16.mxu0 0
        %545 = vmatpush1.bf16.msra.mxu0 0
        %546 = vmatprep.mubr.bf16.mxu0 0
        %547 = vmatmul.mubr.bf16.gmra.mrb[0].mxu0 %v509
        %v548 = vpop.f32.mrb[0].mxu0
        %v549 = vadd.f32 0.0, %v548
        %v550 = vpop.f32.mrb[0].mxu0
        %v551 = vpop.f32.mrb[0].mxu0
        %v552 = vpop.f32.mrb[0].mxu0
        %553 = vdwg.mxu0
        %v554 = vpack.c.bf16 %v549, %v549
        %556 = vrot.lane.b32.xlu0 %v554, 16
        %v557 = vpop.permute.xlu0 %556
        %v560 = vsel %vm331, %v441, %v557
        %v561 = vld [vmem:[%s3] sm:$0xf]
        %v562 = vld [vmem:[%s3 + $0x4] sm:$0xf]
        %v563 = vld [vmem:[%s3 + $0x8] sm:$0xf]
        %v564 = vld [vmem:[%s3 + $0xc] sm:$0xf]
        %v565 = vld [vmem:[%s4] sm:$0x1]
        %v567 = vlaneseq
        %v568 = vshrl.u32 %v567, 7
        %v569 = vsub.s32 0, %v568
        %v570 = vrot.slane %v565, %v569
        %v576 = vunpack.c.l.b16 %v561
        %v577 = vunpack.c.l.b16 %v562
        %v578 = vunpack.c.l.b16 %v563
        %v579 = vunpack.c.l.b16 %v564
        %v580 = vpack.c.b16 %v577, %v576
        %v581 = vpack.c.b16 %v579, %v578
        %v584 = vsel %vm283, %v560, 0
        %586 = vmatprep.subr.bf16.mxu0 0
        %587 = vmatpush1.bf16.msra.mxu0 %v580
        %588 = vmatprep.subr.bf16.mxu0 0
        %589 = vmatpush1.bf16.msra.mxu0 %v581
        %590 = vmatprep.subr.bf16.mxu0 0
        %591 = vmatpush1.bf16.msra.mxu0 0
        %592 = vmatprep.subr.bf16.mxu0 0
        %593 = vmatpush1.bf16.msra.mxu0 0
        %594 = vmatprep.subr.bf16.mxu0 0
        %595 = vmatpush1.bf16.msra.mxu0 0
        %596 = vmatprep.subr.bf16.mxu0 0
        %597 = vmatpush1.bf16.msra.mxu0 0
        %598 = vmatprep.subr.bf16.mxu0 0
        %599 = vmatpush1.bf16.msra.mxu0 0
        %600 = vmatprep.subr.bf16.mxu0 0
        %601 = vmatpush1.bf16.msra.mxu0 0
        %602 = vmatprep.subr.bf16.mxu0 0
        %603 = vmatpush1.bf16.msra.mxu0 0
        %604 = vmatprep.subr.bf16.mxu0 0
        %605 = vmatpush1.bf16.msra.mxu0 0
        %606 = vmatprep.subr.bf16.mxu0 0
        %607 = vmatpush1.bf16.msra.mxu0 0
        %608 = vmatprep.subr.bf16.mxu0 0
        %609 = vmatpush1.bf16.msra.mxu0 0
        %610 = vmatprep.subr.bf16.mxu0 0
        %611 = vmatpush1.bf16.msra.mxu0 0
        %612 = vmatprep.subr.bf16.mxu0 0
        %613 = vmatpush1.bf16.msra.mxu0 0
        %614 = vmatprep.subr.bf16.mxu0 0
        %615 = vmatpush1.bf16.msra.mxu0 0
        %616 = vmatprep.subr.bf16.mxu0 0
        %617 = vmatpush1.bf16.msra.mxu0 0
        %618 = vmatprep.mubr.bf16.mxu0 0
        %619 = vmatmul.mubr.bf16.gmra.mrb[0].mxu0 %v584
        %v620 = vpop.f32.mrb[0].mxu0
        %v621 = vadd.f32 %v570, %v620
        %v622 = vpop.f32.mrb[0].mxu0
        %v623 = vpop.f32.mrb[0].mxu0
        %v624 = vpop.f32.mrb[0].mxu0
        %625 = vdwg.mxu0
        %626 = vst.msk [vmem:[%s246] sm:$0xff] %vm283, %v621
        %s627 = sand.u32 %s142, 1
        %s628 = scalar_lea.sflag [#allocation3], %s627
        %s629 = sand.u32 %s142, 1
        %s630 = smul.addr %s629, 8
        %s631 = scalar_lea.vmem [#allocation2], %s630
        %s632 = sand.u32 %s168, 1
        %s633 = scalar_lea.sflag [#allocation5], %s632
        %s634 = sand.u32 %s168, 1
        %s635 = smul.addr %s634, 16
        %s636 = scalar_lea.vmem [#allocation4], %s635
        // Predicated region
        $region41: #{self_attention_forward.1} parent=39 // pred_check
          %p637 = pneg %p152
        $region42: #{self_attention_forward.1} parent=39 // pred_check_branch
          %639 = sbr.rel (%p637) target = $region44
        $region43: #{self_attention_forward.1} parent=39 // pred_region
          %s641 = ssub.s32 128, 128
          %642 = vsyncadd %s628, %s641
          %s643 = smul.addr %s24, 128
          %s644 = scalar_lea.hbm %s5, %s643
          %s646 = sshll.u32 %s631, 4
          %s647 = int_to_ptr.vmem [resolvable:$true] %s646
          %649 = dma.vmem_to_hbm [thread:$0]  %s647, 128, %s644, %s628
        $region44: #{self_attention_forward.1} parent=39 // pred_fallthru
          _
        // Predicated region
        $region45: #{self_attention_forward.1} parent=39 // pred_check
          %p650 = pneg %p178
        $region46: #{self_attention_forward.1} parent=39 // pred_check_branch
          %652 = sbr.rel (%p650) target = $region48
        $region47: #{self_attention_forward.1} parent=39 // pred_region
          %s654 = ssub.s32 256, 256
          %655 = vsyncadd %s633, %s654
          %s656 = smul.addr %s24, 128
          %s657 = scalar_lea.hbm %s6, %s656
          %s658 = sshll.u32 %s636, 4
          %s659 = int_to_ptr.vmem [resolvable:$true] %s658
          %664 = dma.vmem_to_hbm [thread:$0]  %s659, 256, %s657, %s633, 128, 256, 8
        $region48: #{self_attention_forward.1} parent=39 // pred_fallthru
          _
      $region40: #{self_attention_forward.1} parent=5 // pred_fallthru
        _
      %p665 = scmp.le.s32.totalorder 2, %s19
      // Predicated region
      $region49: #{self_attention_forward.1} parent=5 // pred_check
        %p666 = pneg %p665
      $region50: #{self_attention_forward.1} parent=5 // pred_check_branch
        %668 = sbr.rel (%p666) target = $region52
      $region51: #{self_attention_forward.1} parent=5 // pred_region
        %s669 = ssub.s32 %s19, 2
        // Predicated region
        $region53: #{self_attention_forward.1} parent=51 // pred_check
          %p670 = pneg %p158
        $region54: #{self_attention_forward.1} parent=51 // pred_check_branch
          %672 = sbr.rel (%p670) target = $region56
        $region55: #{self_attention_forward.1} parent=51 // pred_region
          %s673 = sand.u32 %s143, 1
          %s674 = scalar_lea.sflag [#allocation3], %s673
          %s675 = sand.u32 %s143, 1
          %s676 = smul.addr %s675, 8
          %s677 = scalar_lea.vmem [#allocation2], %s676
          %678 = dma.done %s674, 128
        $region56: #{self_attention_forward.1} parent=51 // pred_fallthru
          _
        // Predicated region
        $region57: #{self_attention_forward.1} parent=51 // pred_check
          %p679 = pneg %p184
        $region58: #{self_attention_forward.1} parent=51 // pred_check_branch
          %681 = sbr.rel (%p679) target = $region60
        $region59: #{self_attention_forward.1} parent=51 // pred_region
          %s682 = sand.u32 %s169, 1
          %s683 = scalar_lea.sflag [#allocation5], %s682
          %s684 = sand.u32 %s169, 1
          %s685 = smul.addr %s684, 16
          %s686 = scalar_lea.vmem [#allocation4], %s685
          %687 = dma.done %s683, 256
        $region60: #{self_attention_forward.1} parent=51 // pred_fallthru
          _
      $region52: #{self_attention_forward.1} parent=5 // pred_fallthru
        _
    $region6: #{self_attention_forward.1} parent=1 // loop_footer
      %s23 = sadd.s32 1, %s19
    $region7: #{self_attention_forward.1} parent=1 // loop_footer_branch
      %18 = sbr.rel target = $region3
    $region8: #{self_attention_forward.1} parent=1 // loop_exit
      _
    %688 = vsyncpa [#allocation3], 1
    %s689 = scalar_lea.sflag [#allocation3], 1
    %690 = vsyncpa %s689, 1
    %691 = vsyncpa [#allocation5], 1
    %s692 = scalar_lea.sflag [#allocation5], 1
    %693 = vsyncpa %s692, 1

</llo_original>
